<compile_context>
chip_gen: v7x
topology: tpu7x:2x2x1
jax: 0.10.0
libtpu: 0.0.40
codegen_flags: <defaults>
</compile_context>

<pallas_src>
import functools

import numpy as np

import jax
import jax.numpy as jnp
from jax import lax
from jax.experimental import pallas as pl
from jax.experimental.pallas import tpu as pltpu

MAX_ITER = 150
LR = 0.5


def _round_up(x, m):
    return ((x + m - 1) // m) * m


def _vmem_cap_bytes():
    """~80% of this generation's physical per-core VMEM (conservative fallback)."""
    try:
        cap = int(pltpu.get_tpu_info().vmem_capacity_bytes)
    except Exception:  # pragma: no cover - fallback if query unavailable
        cap = 64 * 1024 * 1024  # v7x per-TC VMEM (smallest of the family)
    return int(cap * 0.8)


# ---------------------------------------------------------------------------
# Fused kernel: compacted-train-set full-batch GD + full-set accuracy scoring.
# Class-indexed tensors are class-major (C, N): nodes sit on the lane axis.
# ---------------------------------------------------------------------------
def _nodeclass_kernel(zt_ref, ytr_ref, z_ref, y_ref, te_ref, va_ref,
                      test_acc_ref, val_acc_ref, *,
                      num_classes, max_iter, scale, n_train):
    c = num_classes

    # ----------------------- training (train rows only) ----------------------
    zt = zt_ref[...]                                  # (Nt_pad, D_pad) bf16
    nt_pad, d_pad = zt.shape

    ytr = ytr_ref[...]                                # (1, Nt_pad) int32
    class_iota_t = lax.broadcasted_iota(jnp.int32, (c, nt_pad), 0)
    y1h_t = (class_iota_t == ytr).astype(jnp.float32)            # (C, Nt_pad)

    # Valid-column mask built in-kernel (compacted layout: cols [0, n_train)).
    col_iota = lax.broadcasted_iota(jnp.int32, (1, nt_pad), 1)
    valid = (col_iota < n_train).astype(jnp.float32)             # (1, Nt_pad)

    # (C, D) x (Nt, D), contracting D -> (C, Nt); no transpose materialized.
    dn_cd = (((1,), (1,)), ((), ()))

    def step(_, carry):
        w, b = carry                                             # (C, D_pad), (C, 1) f32
        logits_t = lax.dot_general(w.astype(jnp.bfloat16), zt, dn_cd,
                                   preferred_element_type=jnp.float32) + b
        logits_t = logits_t - jnp.max(logits_t, axis=0, keepdims=True)
        e = jnp.exp(logits_t)
        p = e * pl.reciprocal(jnp.sum(e, axis=0, keepdims=True), approx=True)
        err = (p - y1h_t) * valid                                # mask folded into error
        # Gradients: one MXU matmul (f32 accumulation) + one XLU lane reduce.
        gw = jnp.dot(err.astype(jnp.bfloat16), zt,
                     preferred_element_type=jnp.float32)         # (C, D_pad)
        gb = jnp.sum(err, axis=1, keepdims=True)                 # (C, 1)
        return (w - scale * gw, b - scale * gb)

    w0 = jnp.zeros((c, d_pad), jnp.float32)
    b0 = jnp.zeros((c, 1), jnp.float32)
    w, b = lax.fori_loop(0, max_iter, step, (w0, b0))

    # ------------------------- fused scoring (full z) ------------------------
    z = z_ref[...]                                    # (N_pad, D_pad) bf16
    n_pad = z.shape[0]
    y_row = y_ref[...]                                # (1, N_pad) int32
    te_row = te_ref[...]                              # (1, N_pad) f32
    va_row = va_ref[...]                              # (1, N_pad) f32

    logits_t = lax.dot_general(w.astype(jnp.bfloat16), z, dn_cd,
                               preferred_element_type=jnp.float32) + b       # (C, N_pad)
    class_iota = lax.broadcasted_iota(jnp.int32, (c, n_pad), 0)
    row_max = jnp.max(logits_t, axis=0, keepdims=True)
    # argmax over classes with first-index tie-breaking (matches numpy/sklearn).
    pred = jnp.min(jnp.where(logits_t == row_max, class_iota, c),
                   axis=0, keepdims=True)                                    # (1, N_pad)
    correct = (pred == y_row).astype(jnp.float32)

    test_acc_ref[...] = (jnp.sum(correct * te_row, keepdims=True)
                         / jnp.maximum(jnp.sum(te_row, keepdims=True), 1.0))
    val_acc_ref[...] = (jnp.sum(correct * va_row, keepdims=True)
                        / jnp.maximum(jnp.sum(va_row, keepdims=True), 1.0))


# ---------------------------------------------------------------------------
# Wrapper: Node_Class.forward(z, data, splits) -> (test_acc, val_acc)
# ---------------------------------------------------------------------------
def node_class_forward(z, y, train_mask, val_mask, test_mask, num_classes,
                       max_iter=MAX_ITER, lr=LR):
    z = jnp.asarray(z, jnp.float32)
    y = jnp.asarray(y, jnp.int32)
    n, d = z.shape

    # Masks are concrete (the PyTorch reference also pulls them to host numpy),
    # so the train set can be compacted statically.
    tr_np = np.asarray(jax.device_get(train_mask)).astype(bool).reshape(-1)
    te_np = np.asarray(jax.device_get(test_mask)).astype(np.float32).reshape(-1)
    va_np = np.asarray(jax.device_get(val_mask)).astype(np.float32).reshape(-1)
    train_idx = np.nonzero(tr_np)[0]
    n_train = int(train_idx.size)
    n_train_safe = max(n_train, 1)

    # Lane / sublane friendly padding (zero padding is numerically inert).
    d_pad = _round_up(d, 128)
    n_pad = _round_up(n, 128)
    nt_pad = _round_up(n_train_safe, 128)

    # Full embeddings (scoring pass only), padded, bf16 for MXU + half the DMA.
    z_full = jnp.zeros((n_pad, d_pad), jnp.float32).at[:n, :d].set(z)
    z_full_bf = z_full.astype(jnp.bfloat16)

    # Compacted train embeddings / labels for the GD loop.
    z_tr = jnp.zeros((nt_pad, d_pad), jnp.float32)
    y_tr_row = jnp.zeros((1, nt_pad), jnp.int32)
    if n_train > 0:
        z_tr = z_tr.at[:n_train, :d].set(z[train_idx, :])
        y_tr_row = y_tr_row.at[0, :n_train].set(y[train_idx])
    z_tr_bf = z_tr.astype(jnp.bfloat16)

    y_row = jnp.zeros((1, n_pad), jnp.int32).at[0, :n].set(y)
    te_row = jnp.zeros((1, n_pad), jnp.float32).at[0, :n].set(jnp.asarray(te_np))
    va_row = jnp.zeros((1, n_pad), jnp.float32).at[0, :n].set(jnp.asarray(va_np))

    vmem = pl.BlockSpec(memory_space=pltpu.MemorySpace.VMEM)

    # Scoped-VMEM limit sized to the actual resident working set, capped per
    # generation (never the full physical VMEM).
    c = int(num_classes)
    est_bytes = (n_pad * d_pad * 2                 # z_full (bf16)
                 + nt_pad * d_pad * 2              # z_train (bf16)
                 + 8 * c * nt_pad * 4              # (C, Nt) f32 loop temporaries
                 + 4 * c * n_pad * 4               # (C, N) f32 scoring temporaries
                 + 6 * n_pad * 4                   # label / mask rows
                 + 4 * c * (d_pad + 1) * 4)        # w/b carries + grads
    vmem_limit = int(min(max(2 * est_bytes, 16 * 1024 * 1024), _vmem_cap_bytes()))

    kernel = functools.partial(
        _nodeclass_kernel,
        num_classes=c,
        max_iter=int(max_iter),
        scale=float(lr) / float(n_train_safe),     # exact, computed once
        n_train=n_train_safe,
    )

    test_acc, val_acc = pl.pallas_call(
        kernel,
        out_shape=(jax.ShapeDtypeStruct((1, 1), jnp.float32),
                   jax.ShapeDtypeStruct((1, 1), jnp.float32)),
        in_specs=[vmem, vmem, vmem, vmem, vmem, vmem],
        out_specs=(vmem, vmem),
        compiler_params=pltpu.CompilerParams(vmem_limit_bytes=vmem_limit),
    )(z_tr_bf, y_tr_row, z_full_bf, y_row, te_row, va_row)

    return test_acc[0, 0], val_acc[0, 0]


if __name__ == "__main__":
    key = jax.random.PRNGKey(0)
    N, D, C = 64, 32, 4

    k_z, k_y = jax.random.split(key)
    # Embeddings with a class-dependent signal so accuracy is non-trivial.
    y = jax.random.randint(k_y, (N,), 0, C, dtype=jnp.int32)
    centers = jax.random.normal(k_z, (C, D), dtype=jnp.float32) * 2.0
    z = centers[y] + 0.5 * jax.random.normal(jax.random.PRNGKey(1), (N, D),
                                             dtype=jnp.float32)

    idx = jnp.arange(N)
    train_mask = idx < 32
    val_mask = (idx >= 32) & (idx < 48)
    test_mask = idx >= 48

    test_acc, val_acc = node_class_forward(z, y, train_mask, val_mask,
                                           test_mask, C)
    jax.block_until_ready((test_acc, val_acc))
    print("KERNEL_OK")
</pallas_src>

<mosaic_0001>
module attributes {stable_mosaic.version = 11 : i64} {
  func.func @_nodeclass_kernel(%arg0: memref<128x128xbf16, #tpu.memory_space<vmem>>, %arg1: memref<1x128xi32, #tpu.memory_space<vmem>>, %arg2: memref<128x128xbf16, #tpu.memory_space<vmem>>, %arg3: memref<1x128xi32, #tpu.memory_space<vmem>>, %arg4: memref<1x128xf32, #tpu.memory_space<vmem>>, %arg5: memref<1x128xf32, #tpu.memory_space<vmem>>, %arg6: memref<1x1xf32, #tpu.memory_space<vmem>>, %arg7: memref<1x1xf32, #tpu.memory_space<vmem>>) attributes {dimension_semantics = [], scalar_prefetch = 0 : i64, scratch_operands = 0 : i64, tpu.core_type = #tpu.core_type<tc>} {
    %c0 = arith.constant 0 : index
    %c0_0 = arith.constant 0 : index
    %0 = vector.load %arg0[%c0, %c0_0] : memref<128x128xbf16, #tpu.memory_space<vmem>>, vector<128x128xbf16>
    %c0_1 = arith.constant 0 : index
    %c0_2 = arith.constant 0 : index
    %1 = vector.load %arg1[%c0_1, %c0_2] : memref<1x128xi32, #tpu.memory_space<vmem>>, vector<1x128xi32>
    %2 = tpu.iota {dimensions = array<i32: 0>} : vector<4x128xi32>
    %3 = vector.broadcast %1 : vector<1x128xi32> to vector<4x128xi32>
    %4 = arith.cmpi eq, %2, %3 : vector<4x128xi32>
    %5 = arith.extui %4 : vector<4x128xi1> to vector<4x128xi32>
    %6 = arith.sitofp %5 : vector<4x128xi32> to vector<4x128xf32>
    %7 = tpu.iota {dimensions = array<i32: 1>} : vector<1x128xi32>
    %c32_i32 = arith.constant 32 : i32
    %8 = vector.broadcast %c32_i32 : i32 to vector<1x128xi32>
    %9 = arith.cmpi slt, %7, %8 : vector<1x128xi32>
    %10 = arith.extui %9 : vector<1x128xi1> to vector<1x128xi32>
    %11 = arith.sitofp %10 : vector<1x128xi32> to vector<1x128xf32>
    %cst = arith.constant 0.000000e+00 : f32
    %12 = vector.broadcast %cst : f32 to vector<4x128xf32>
    %cst_3 = arith.constant 0.000000e+00 : f32
    %13 = vector.broadcast %cst_3 : f32 to vector<4x1xf32>
    %c0_i32 = arith.constant 0 : i32
    %c150_i32 = arith.constant 150 : i32
    %14 = arith.addi %c0_i32, %c150_i32 : i32
    %c1_i32 = arith.constant 1 : i32
    %15:2 = scf.for %arg8 = %c0_i32 to %14 step %c1_i32 iter_args(%arg9 = %12, %arg10 = %13) -> (vector<4x128xf32>, vector<4x1xf32>)  : i32 {
      %66 = arith.truncf %arg9 : vector<4x128xf32> to vector<4x128xbf16>
      %cst_25 = arith.constant dense<0.000000e+00> : vector<4x128xf32>
      %67 = tpu.matmul %66, %0, %cst_25 {dimension_numbers = #tpu.dot_dimension_numbers<[1], [1], [0], [0], [0, 0, 1, 0], [], []>} : vector<4x128xbf16>, vector<128x128xbf16>, vector<4x128xf32> -> vector<4x128xf32>
      %68 = vector.broadcast %arg10 : vector<4x1xf32> to vector<4x128xf32>
      %69 = arith.addf %67, %68 : vector<4x128xf32>
      %cst_26 = arith.constant dense<0xFF800000> : vector<128xf32>
      %70 = vector.multi_reduction <maximumf>, %69, %cst_26 [0] : vector<4x128xf32> to vector<128xf32>
      %71 = vector.shape_cast %70 : vector<128xf32> to vector<1x128xf32>
      %72 = vector.broadcast %71 : vector<1x128xf32> to vector<4x128xf32>
      %73 = arith.subf %69, %72 : vector<4x128xf32>
      %74 = math.exp %73 : vector<4x128xf32>
      %cst_27 = arith.constant dense<0.000000e+00> : vector<128xf32>
      %75 = vector.multi_reduction <add>, %74, %cst_27 [0] : vector<4x128xf32> to vector<128xf32>
      %76 = vector.shape_cast %75 : vector<128xf32> to vector<1x128xf32>
      %77 = tpu.reciprocal %76 {approx = true} : vector<1x128xf32> -> vector<1x128xf32>
      %78 = vector.broadcast %77 : vector<1x128xf32> to vector<4x128xf32>
      %79 = arith.mulf %74, %78 : vector<4x128xf32>
      %80 = arith.subf %79, %6 : vector<4x128xf32>
      %81 = vector.broadcast %11 : vector<1x128xf32> to vector<4x128xf32>
      %82 = arith.mulf %80, %81 : vector<4x128xf32>
      %83 = arith.truncf %82 : vector<4x128xf32> to vector<4x128xbf16>
      %cst_28 = arith.constant dense<0.000000e+00> : vector<4x128xf32>
      %84 = tpu.matmul %83, %0, %cst_28 {dimension_numbers = #tpu.dot_dimension_numbers<[1], [0], [0], [1], [0, 0, 1, 1], [], []>} : vector<4x128xbf16>, vector<128x128xbf16>, vector<4x128xf32> -> vector<4x128xf32>
      %cst_29 = arith.constant dense<0.000000e+00> : vector<4xf32>
      %85 = vector.multi_reduction <add>, %82, %cst_29 [1] : vector<4x128xf32> to vector<4xf32>
      %86 = vector.shape_cast %85 : vector<4xf32> to vector<4x1xf32>
      %cst_30 = arith.constant 1.562500e-02 : f32
      %87 = vector.broadcast %cst_30 : f32 to vector<4x128xf32>
      %88 = arith.mulf %87, %84 : vector<4x128xf32>
      %89 = arith.subf %arg9, %88 : vector<4x128xf32>
      %cst_31 = arith.constant 1.562500e-02 : f32
      %90 = vector.broadcast %cst_31 : f32 to vector<4x1xf32>
      %91 = arith.mulf %90, %86 : vector<4x1xf32>
      %92 = arith.subf %arg10, %91 : vector<4x1xf32>
      scf.yield %89, %92 : vector<4x128xf32>, vector<4x1xf32>
    }
    %c0_4 = arith.constant 0 : index
    %c0_5 = arith.constant 0 : index
    %16 = vector.load %arg2[%c0_4, %c0_5] : memref<128x128xbf16, #tpu.memory_space<vmem>>, vector<128x128xbf16>
    %c0_6 = arith.constant 0 : index
    %c0_7 = arith.constant 0 : index
    %17 = vector.load %arg3[%c0_6, %c0_7] : memref<1x128xi32, #tpu.memory_space<vmem>>, vector<1x128xi32>
    %c0_8 = arith.constant 0 : index
    %c0_9 = arith.constant 0 : index
    %18 = vector.load %arg4[%c0_8, %c0_9] : memref<1x128xf32, #tpu.memory_space<vmem>>, vector<1x128xf32>
    %c0_10 = arith.constant 0 : index
    %c0_11 = arith.constant 0 : index
    %19 = vector.load %arg5[%c0_10, %c0_11] : memref<1x128xf32, #tpu.memory_space<vmem>>, vector<1x128xf32>
    %20 = arith.truncf %15#0 : vector<4x128xf32> to vector<4x128xbf16>
    %cst_12 = arith.constant dense<0.000000e+00> : vector<4x128xf32>
    %21 = tpu.matmul %20, %16, %cst_12 {dimension_numbers = #tpu.dot_dimension_numbers<[1], [1], [0], [0], [0, 0, 1, 0], [], []>} : vector<4x128xbf16>, vector<128x128xbf16>, vector<4x128xf32> -> vector<4x128xf32>
    %22 = vector.broadcast %15#1 : vector<4x1xf32> to vector<4x128xf32>
    %23 = arith.addf %21, %22 : vector<4x128xf32>
    %24 = tpu.iota {dimensions = array<i32: 0>} : vector<4x128xi32>
    %cst_13 = arith.constant dense<0xFF800000> : vector<128xf32>
    %25 = vector.multi_reduction <maximumf>, %23, %cst_13 [0] : vector<4x128xf32> to vector<128xf32>
    %26 = vector.shape_cast %25 : vector<128xf32> to vector<1x128xf32>
    %27 = vector.broadcast %26 : vector<1x128xf32> to vector<4x128xf32>
    %28 = arith.cmpf oeq, %23, %27 : vector<4x128xf32>
    %c4_i32 = arith.constant 4 : i32
    %29 = vector.broadcast %c4_i32 : i32 to vector<4x128xi32>
    %30 = arith.select %28, %24, %29 : vector<4x128xi1>, vector<4x128xi32>
    %cst_14 = arith.constant dense<2147483647> : vector<128xi32>
    %31 = vector.multi_reduction <minsi>, %30, %cst_14 [0] : vector<4x128xi32> to vector<128xi32>
    %32 = vector.shape_cast %31 : vector<128xi32> to vector<1x128xi32>
    %33 = arith.cmpi eq, %32, %17 : vector<1x128xi32>
    %34 = arith.extui %33 : vector<1x128xi1> to vector<1x128xi32>
    %35 = arith.sitofp %34 : vector<1x128xi32> to vector<1x128xf32>
    %36 = arith.mulf %35, %18 : vector<1x128xf32>
    %37 = vector.shape_cast %36 : vector<1x128xf32> to vector<1x1x128xf32>
    %cst_15 = arith.constant dense<0.000000e+00> : vector<1xf32>
    %38 = vector.multi_reduction <add>, %37, %cst_15 [1, 2] : vector<1x1x128xf32> to vector<1xf32>
    %39 = vector.shape_cast %38 : vector<1xf32> to vector<1x1x1xf32>
    %40 = vector.extract %39[0, 0, 0] : f32 from vector<1x1x1xf32>
    %41 = vector.broadcast %40 : f32 to vector<1x1xf32>
    %42 = vector.shape_cast %18 : vector<1x128xf32> to vector<1x1x128xf32>
    %cst_16 = arith.constant dense<0.000000e+00> : vector<1xf32>
    %43 = vector.multi_reduction <add>, %42, %cst_16 [1, 2] : vector<1x1x128xf32> to vector<1xf32>
    %44 = vector.shape_cast %43 : vector<1xf32> to vector<1x1x1xf32>
    %45 = vector.extract %44[0, 0, 0] : f32 from vector<1x1x1xf32>
    %46 = vector.broadcast %45 : f32 to vector<1x1xf32>
    %cst_17 = arith.constant 1.000000e+00 : f32
    %47 = vector.broadcast %cst_17 : f32 to vector<1x1xf32>
    %48 = arith.maximumf %46, %47 : vector<1x1xf32>
    %49 = arith.divf %41, %48 : vector<1x1xf32>
    %c0_18 = arith.constant 0 : index
    %c0_19 = arith.constant 0 : index
    %50 = vector.load %arg6[%c0_18, %c0_19] : memref<1x1xf32, #tpu.memory_space<vmem>>, vector<1x1xf32>
    tpu.vector_store %arg6[%c0_18, %c0_19], %49 {strides = array<i32>} : memref<1x1xf32, #tpu.memory_space<vmem>>, vector<1x1xf32>,
    %51 = arith.mulf %35, %19 : vector<1x128xf32>
    %52 = vector.shape_cast %51 : vector<1x128xf32> to vector<1x1x128xf32>
    %cst_20 = arith.constant dense<0.000000e+00> : vector<1xf32>
    %53 = vector.multi_reduction <add>, %52, %cst_20 [1, 2] : vector<1x1x128xf32> to vector<1xf32>
    %54 = vector.shape_cast %53 : vector<1xf32> to vector<1x1x1xf32>
    %55 = vector.extract %54[0, 0, 0] : f32 from vector<1x1x1xf32>
    %56 = vector.broadcast %55 : f32 to vector<1x1xf32>
    %57 = vector.shape_cast %19 : vector<1x128xf32> to vector<1x1x128xf32>
    %cst_21 = arith.constant dense<0.000000e+00> : vector<1xf32>
    %58 = vector.multi_reduction <add>, %57, %cst_21 [1, 2] : vector<1x1x128xf32> to vector<1xf32>
    %59 = vector.shape_cast %58 : vector<1xf32> to vector<1x1x1xf32>
    %60 = vector.extract %59[0, 0, 0] : f32 from vector<1x1x1xf32>
    %61 = vector.broadcast %60 : f32 to vector<1x1xf32>
    %cst_22 = arith.constant 1.000000e+00 : f32
    %62 = vector.broadcast %cst_22 : f32 to vector<1x1xf32>
    %63 = arith.maximumf %61, %62 : vector<1x1xf32>
    %64 = arith.divf %56, %63 : vector<1x1xf32>
    %c0_23 = arith.constant 0 : index
    %c0_24 = arith.constant 0 : index
    %65 = vector.load %arg7[%c0_23, %c0_24] : memref<1x1xf32, #tpu.memory_space<vmem>>, vector<1x1xf32>
    tpu.vector_store %arg7[%c0_23, %c0_24], %64 {strides = array<i32>} : memref<1x1xf32, #tpu.memory_space<vmem>>, vector<1x1xf32>,
    return
  }
}

</mosaic_0001>

<llo_original>
// kernel: tpu_custom_call.1
$region0: #{tpu_custom_call.1}
  #allocation0 [shape = 'u32[]', space=smem, size = 0x4, offset = 0x4, fixed_abs, tag = 'smem constant byte address 0x4 - core index']
  #allocation1 [shape = 'u32[144,128]{1,0:T(1,128)}', space=vmem, size = 0x12000, scoped, tag = 'internal scratch']
  %s0 = inlined_call_operand.hbm [shape: bf16[128,128], index: 0, kind: input, shape index: {}]
  %s1 = inlined_call_operand.vmem [shape: s32[1,128], index: 1, kind: input, shape index: {}]
  %s2 = inlined_call_operand.hbm [shape: bf16[128,128], index: 2, kind: input, shape index: {}]
  %s3 = inlined_call_operand.vmem [shape: s32[1,128], index: 3, kind: input, shape index: {}]
  %s4 = inlined_call_operand.vmem [shape: f32[1,128], index: 4, kind: input, shape index: {}]
  %s5 = inlined_call_operand.vmem [shape: f32[1,128], index: 5, kind: input, shape index: {}]
  %s6 = inlined_call_operand.hbm [shape: f32[1,1], index: 6, kind: output, shape index: {0}]
  %s7 = inlined_call_operand.hbm [shape: f32[1,1], index: 7, kind: output, shape index: {1}]
  %8 = xla_tuple %s6, %s7
  %s9 = sld [smem:[#allocation0]]
  $region57: #{tpu_custom_call.1} parent=0
    _
  %s11 = ssub.s32 1, %s9
  %s12 = scalar_select 0, %s11, %s9
  $region1: #{tpu_custom_call.1} parent=0
    #allocation2 [shape = 'u8[32768]{0}', space=vmem, size = 0x8000, scoped, tag = 'input window, operand 0, single buffered']
    #allocation3 [shape = 's32[1]{0}', space=sflag, size = 0x4, scoped, tag = 'scoped memory for tpu_custom_call.1']
    #allocation4 [shape = 's32[1]{0}', space=sflag, size = 0x4, scoped, tag = 'scoped memory for tpu_custom_call.1']
    #allocation5 [shape = 'u8[32768]{0}', space=vmem, size = 0x8000, scoped, tag = 'input window, operand 2, single buffered']
    #allocation6 [shape = 's32[1]{0}', space=sflag, size = 0x4, scoped, tag = 'scoped memory for tpu_custom_call.1']
    #allocation7 [shape = 'u8[512]{0}', space=vmem, size = 0x400, scoped, tag = 'output window, operand 0, single buffered']
    #allocation8 [shape = 'u8[512]{0}', space=vmem, size = 0x400, scoped, tag = 'output window, operand 1, single buffered']
    #allocation9 [shape = 's32[1]{0}', space=sflag, size = 0x4, scoped, tag = 'scoped memory for tpu_custom_call.1']
    %13 = vsyncpa [#allocation3], 0
    %14 = vsyncpa [#allocation6], 0
    %15 = vsyncpa [#allocation4], 0
    %16 = vsyncpa [#allocation9], 0
    // Predicated region
    $region2: #{tpu_custom_call.1} parent=1 // pred_check
      _
    $region3: #{tpu_custom_call.1} parent=1 // pred_check_branch
      %18 = sbr.rel (0) target = $region5
    $region4: #{tpu_custom_call.1} parent=1 // pred_region
      %s20 = ssub.s32 1024, 1024
      %21 = vsyncadd [#allocation3], %s20
      %s22 = sshll.u32 [#allocation2], 4
      %s23 = int_to_ptr.vmem [resolvable:$true] %s22
      %28 = dma.hbm_to_vmem [thread:$0]  %s0, 1024, %s23, [#allocation3], 64, 64, 4
    $region5: #{tpu_custom_call.1} parent=1 // pred_fallthru
      _
    // Predicated region
    $region6: #{tpu_custom_call.1} parent=1 // pred_check
      _
    $region7: #{tpu_custom_call.1} parent=1 // pred_check_branch
      %30 = sbr.rel (0) target = $region9
    $region8: #{tpu_custom_call.1} parent=1 // pred_region
      _
    $region9: #{tpu_custom_call.1} parent=1 // pred_fallthru
      _
    // Predicated region
    $region10: #{tpu_custom_call.1} parent=1 // pred_check
      _
    $region11: #{tpu_custom_call.1} parent=1 // pred_check_branch
      %32 = sbr.rel (0) target = $region13
    $region12: #{tpu_custom_call.1} parent=1 // pred_region
      %s34 = ssub.s32 1024, 1024
      %35 = vsyncadd [#allocation6], %s34
      %s36 = sshll.u32 [#allocation5], 4
      %s37 = int_to_ptr.vmem [resolvable:$true] %s36
      %42 = dma.hbm_to_vmem [thread:$0]  %s2, 1024, %s37, [#allocation6], 64, 64, 4
    $region13: #{tpu_custom_call.1} parent=1 // pred_fallthru
      _
    // Predicated region
    $region14: #{tpu_custom_call.1} parent=1 // pred_check
      _
    $region15: #{tpu_custom_call.1} parent=1 // pred_check_branch
      %44 = sbr.rel (0) target = $region17
    $region16: #{tpu_custom_call.1} parent=1 // pred_region
      _
    $region17: #{tpu_custom_call.1} parent=1 // pred_fallthru
      _
    // Predicated region
    $region18: #{tpu_custom_call.1} parent=1 // pred_check
      _
    $region19: #{tpu_custom_call.1} parent=1 // pred_check_branch
      %46 = sbr.rel (0) target = $region21
    $region20: #{tpu_custom_call.1} parent=1 // pred_region
      _
    $region21: #{tpu_custom_call.1} parent=1 // pred_fallthru
      _
    // Predicated region
    $region22: #{tpu_custom_call.1} parent=1 // pred_check
      _
    $region23: #{tpu_custom_call.1} parent=1 // pred_check_branch
      %48 = sbr.rel (0) target = $region25
    $region24: #{tpu_custom_call.1} parent=1 // pred_region
      _
    $region25: #{tpu_custom_call.1} parent=1 // pred_fallthru
      _
    // Predicated region
    $region26: #{tpu_custom_call.1} parent=1 // pred_check
      _
    $region27: #{tpu_custom_call.1} parent=1 // pred_check_branch
      %50 = sbr.rel (0) target = $region29
    $region28: #{tpu_custom_call.1} parent=1 // pred_region
      %51 = dma.done [#allocation3], 1024
    $region29: #{tpu_custom_call.1} parent=1 // pred_fallthru
      _
    // Predicated region
    $region30: #{tpu_custom_call.1} parent=1 // pred_check
      _
    $region31: #{tpu_custom_call.1} parent=1 // pred_check_branch
      %53 = sbr.rel (0) target = $region33
    $region32: #{tpu_custom_call.1} parent=1 // pred_region
      %54 = dma.done [#allocation6], 1024
    $region33: #{tpu_custom_call.1} parent=1 // pred_fallthru
      _
    %v56 = vld [vmem:[#allocation2] sm:$0xf]
    %v57 = vld [vmem:[#allocation2 + $0x4] sm:$0xf]
    %v58 = vld [vmem:[#allocation2 + $0x8] sm:$0xf]
    %v59 = vld [vmem:[#allocation2 + $0xc] sm:$0xf]
    %v60 = vld [vmem:[#allocation2 + $0x10] sm:$0xf]
    %v61 = vld [vmem:[#allocation2 + $0x14] sm:$0xf]
    %v62 = vld [vmem:[#allocation2 + $0x18] sm:$0xf]
    %v63 = vld [vmem:[#allocation2 + $0x1c] sm:$0xf]
    %v64 = vld [vmem:[#allocation2 + $0x20] sm:$0xf]
    %v65 = vld [vmem:[#allocation2 + $0x24] sm:$0xf]
    %v66 = vld [vmem:[#allocation2 + $0x28] sm:$0xf]
    %v67 = vld [vmem:[#allocation2 + $0x2c] sm:$0xf]
    %v68 = vld [vmem:[#allocation2 + $0x30] sm:$0xf]
    %v69 = vld [vmem:[#allocation2 + $0x34] sm:$0xf]
    %v70 = vld [vmem:[#allocation2 + $0x38] sm:$0xf]
    %v71 = vld [vmem:[#allocation2 + $0x3c] sm:$0xf]
    %v72 = vld [vmem:[%s1] sm:$0x1]
    %v73 = vlaneseq
    %v74 = vshrl.u32 %v73, 7
    %v75 = vlaneseq
    %v76 = vshrl.u32 %v75, 7
    %v77 = vsub.s32 0, %v76
    %v78 = vrot.slane %v72, %v77
    %vm79 = vcmp.eq.s32.totalorder %v74, %v78
    %v80 = vsel %vm79, 1, 0
    %v81 = vcvt.s32.f32 %v80
    %v82 = vlaneseq
    %v83 = vand.u32 %v82, 127
    %vm84 = vcmp.lt.s32.totalorder %v83, 32
    %v85 = vsel %vm84, 1, 0
    %v86 = vcvt.s32.f32 %v85
    loop: start=0, step=1, limit=150
    $region34: #{tpu_custom_call.1} parent=1 // loop_pre_header
      _
    $region35: #{tpu_custom_call.1} parent=1 // loop_header
      %s88 = sphi 0, %s92
      %p89 = scmp.ge.s32.totalorder %s88, 150
      %v93 = vphi 0.0, %v251
      %v94 = vphi 0.0, %v253
    $region36: #{tpu_custom_call.1} parent=1 // loop_header_branch
      %91 = sbr.rel (%p89) target = $region40
    $region37: #{tpu_custom_call.1} parent=1 // loop_body
      %v95 = vpack.c.bf16 %v93, %v93
      %v112 = vunpack.c.l.b16 %v56
      %v113 = vunpack.c.l.b16 %v57
      %v114 = vunpack.c.l.b16 %v58
      %v115 = vunpack.c.l.b16 %v59
      %v116 = vunpack.c.l.b16 %v60
      %v117 = vunpack.c.l.b16 %v61
      %v118 = vunpack.c.l.b16 %v62
      %v119 = vunpack.c.l.b16 %v63
      %v120 = vunpack.c.l.b16 %v64
      %v121 = vunpack.c.l.b16 %v65
      %v122 = vunpack.c.l.b16 %v66
      %v123 = vunpack.c.l.b16 %v67
      %v124 = vunpack.c.l.b16 %v68
      %v125 = vunpack.c.l.b16 %v69
      %v126 = vunpack.c.l.b16 %v70
      %v127 = vunpack.c.l.b16 %v71
      %v128 = vpack.c.b16 %v113, %v112
      %v129 = vpack.c.b16 %v115, %v114
      %v130 = vpack.c.b16 %v117, %v116
      %v131 = vpack.c.b16 %v119, %v118
      %v132 = vpack.c.b16 %v121, %v120
      %v133 = vpack.c.b16 %v123, %v122
      %v134 = vpack.c.b16 %v125, %v124
      %v135 = vpack.c.b16 %v127, %v126
      %144 = vmatprep.subr.bf16.mxu0 0
      %145 = vmatpush1.bf16.xpose.msra.mxu0 %v128
      %146 = vmatprep.subr.bf16.mxu0 0
      %147 = vmatpush1.bf16.xpose.msra.mxu0 %v129
      %148 = vmatprep.subr.bf16.mxu0 0
      %149 = vmatpush1.bf16.xpose.msra.mxu0 %v130
      %150 = vmatprep.subr.bf16.mxu0 0
      %151 = vmatpush1.bf16.xpose.msra.mxu0 %v131
      %152 = vmatprep.subr.bf16.mxu0 0
      %153 = vmatpush1.bf16.xpose.msra.mxu0 %v132
      %154 = vmatprep.subr.bf16.mxu0 0
      %155 = vmatpush1.bf16.xpose.msra.mxu0 %v133
      %156 = vmatprep.subr.bf16.mxu0 0
      %157 = vmatpush1.bf16.xpose.msra.mxu0 %v134
      %158 = vmatprep.subr.bf16.mxu0 0
      %159 = vmatpush1.bf16.xpose.msra.mxu0 %v135
      %160 = vmatprep.subr.bf16.mxu0 0
      %161 = vmatpush1.bf16.xpose.msra.mxu0 0
      %162 = vmatprep.subr.bf16.mxu0 0
      %163 = vmatpush1.bf16.xpose.msra.mxu0 0
      %164 = vmatprep.subr.bf16.mxu0 0
      %165 = vmatpush1.bf16.xpose.msra.mxu0 0
      %166 = vmatprep.subr.bf16.mxu0 0
      %167 = vmatpush1.bf16.xpose.msra.mxu0 0
      %168 = vmatprep.subr.bf16.mxu0 0
      %169 = vmatpush1.bf16.xpose.msra.mxu0 0
      %170 = vmatprep.subr.bf16.mxu0 0
      %171 = vmatpush1.bf16.xpose.msra.mxu0 0
      %172 = vmatprep.subr.bf16.mxu0 0
      %173 = vmatpush1.bf16.xpose.msra.mxu0 0
      %174 = vmatprep.subr.bf16.mxu0 0
      %175 = vmatpush1.bf16.xpose.msra.mxu0 0
      %176 = vmatprep.mubr.bf16.mxu0 0
      %177 = vmatmul.mubr.bf16.gmra.mrb[0].mxu0 %v95
      %v178 = vpop.f32.mrb[0].mxu0
      %v179 = vadd.f32 %v94, %v178
      %v180 = vpop.f32.mrb[0].mxu0
      %v181 = vpop.f32.mrb[0].mxu0
      %v182 = vpop.f32.mrb[0].mxu0
      %183 = vdwg.mxu0
      %vm184 = vcmask 1043456
      %v185 = vsel %vm184, %v179, -inf
      %v186 = vrot.slane %v185, 4
      %v187 = vmax.f32 %v185, %v186
      %v188 = vrot.slane %v187, 2
      %v189 = vmax.f32 %v187, %v188
      %v190 = vrot.slane %v189, 1
      %v191 = vmax.f32 %v189, %v190
      %v192 = vsub.f32 %v179, %v191
      %v193 = vmul.f32 %v192, 1.442695
      %v194 = vpow.pop %v193
      %v195 = vsel %vm184, %v194, 0.0
      %v196 = vrot.slane %v195, 4
      %v197 = vadd.f32 %v195, %v196
      %v198 = vrot.slane %v197, 2
      %v199 = vadd.f32 %v197, %v198
      %v200 = vrot.slane %v199, 1
      %v201 = vadd.f32 %v199, %v200
      %v202 = vrcp.pop %v201
      %v203 = vmul.f32 %v194, %v202
      %v204 = vsub.f32 %v203, %v81
      %v205 = vmul.f32 %v204, %v86
      %v206 = vpack.c.bf16 %v205, %v205
      %207 = vmatprep.subr.bf16.mxu0 0
      %208 = vmatpush1.bf16.msra.mxu0 %v128
      %209 = vmatprep.subr.bf16.mxu0 0
      %210 = vmatpush1.bf16.msra.mxu0 %v129
      %211 = vmatprep.subr.bf16.mxu0 0
      %212 = vmatpush1.bf16.msra.mxu0 %v130
      %213 = vmatprep.subr.bf16.mxu0 0
      %214 = vmatpush1.bf16.msra.mxu0 %v131
      %215 = vmatprep.subr.bf16.mxu0 0
      %216 = vmatpush1.bf16.msra.mxu0 %v132
      %217 = vmatprep.subr.bf16.mxu0 0
      %218 = vmatpush1.bf16.msra.mxu0 %v133
      %219 = vmatprep.subr.bf16.mxu0 0
      %220 = vmatpush1.bf16.msra.mxu0 %v134
      %221 = vmatprep.subr.bf16.mxu0 0
      %222 = vmatpush1.bf16.msra.mxu0 %v135
      %223 = vmatprep.subr.bf16.mxu0 0
      %224 = vmatpush1.bf16.msra.mxu0 0
      %225 = vmatprep.subr.bf16.mxu0 0
      %226 = vmatpush1.bf16.msra.mxu0 0
      %227 = vmatprep.subr.bf16.mxu0 0
      %228 = vmatpush1.bf16.msra.mxu0 0
      %229 = vmatprep.subr.bf16.mxu0 0
      %230 = vmatpush1.bf16.msra.mxu0 0
      %231 = vmatprep.subr.bf16.mxu0 0
      %232 = vmatpush1.bf16.msra.mxu0 0
      %233 = vmatprep.subr.bf16.mxu0 0
      %234 = vmatpush1.bf16.msra.mxu0 0
      %235 = vmatprep.subr.bf16.mxu0 0
      %236 = vmatpush1.bf16.msra.mxu0 0
      %237 = vmatprep.subr.bf16.mxu0 0
      %238 = vmatpush1.bf16.msra.mxu0 0
      %239 = vmatprep.mubr.bf16.mxu0 0
      %240 = vmatmul.mubr.bf16.gmra.mrb[0].mxu0 %v206
      %v241 = vpop.f32.mrb[0].mxu0
      %v242 = vadd.f32 0.0, %v241
      %v243 = vpop.f32.mrb[0].mxu0
      %v244 = vpop.f32.mrb[0].mxu0
      %v245 = vpop.f32.mrb[0].mxu0
      %246 = vdwg.mxu0
      %v247 = vsel %vm184, %v205, 0.0
      %248 = vadd.xlane.f32.xlu0 %v247
      %v249 = vpop.xlane.xlu0 %248
      %v250 = vmul.f32 %v242, 0.015625
      %v251 = vsub.f32 %v93, %v250
      %v252 = vmul.f32 %v249, 0.015625
      %v253 = vsub.f32 %v94, %v252
    $region38: #{tpu_custom_call.1} parent=1 // loop_footer
      %s92 = sadd.s32 1, %s88
    $region39: #{tpu_custom_call.1} parent=1 // loop_footer_branch
      %87 = sbr.rel target = $region35
    $region40: #{tpu_custom_call.1} parent=1 // loop_exit
      _
    %v254 = vld [vmem:[#allocation5] sm:$0xf]
    %v255 = vld [vmem:[#allocation5 + $0x4] sm:$0xf]
    %v256 = vld [vmem:[#allocation5 + $0x8] sm:$0xf]
    %v257 = vld [vmem:[#allocation5 + $0xc] sm:$0xf]
    %v258 = vld [vmem:[#allocation5 + $0x10] sm:$0xf]
    %v259 = vld [vmem:[#allocation5 + $0x14] sm:$0xf]
    %v260 = vld [vmem:[#allocation5 + $0x18] sm:$0xf]
    %v261 = vld [vmem:[#allocation5 + $0x1c] sm:$0xf]
    %v262 = vld [vmem:[#allocation5 + $0x20] sm:$0xf]
    %v263 = vld [vmem:[#allocation5 + $0x24] sm:$0xf]
    %v264 = vld [vmem:[#allocation5 + $0x28] sm:$0xf]
    %v265 = vld [vmem:[#allocation5 + $0x2c] sm:$0xf]
    %v266 = vld [vmem:[#allocation5 + $0x30] sm:$0xf]
    %v267 = vld [vmem:[#allocation5 + $0x34] sm:$0xf]
    %v268 = vld [vmem:[#allocation5 + $0x38] sm:$0xf]
    %v269 = vld [vmem:[#allocation5 + $0x3c] sm:$0xf]
    %v270 = vld [vmem:[%s3] sm:$0x1]
    %v271 = vld [vmem:[%s4] sm:$0x1]
    %v272 = vld [vmem:[%s5] sm:$0x1]
    %v273 = vpack.c.bf16 %v93, %v93
    %v290 = vunpack.c.l.b16 %v254
    %v291 = vunpack.c.l.b16 %v255
    %v292 = vunpack.c.l.b16 %v256
    %v293 = vunpack.c.l.b16 %v257
    %v294 = vunpack.c.l.b16 %v258
    %v295 = vunpack.c.l.b16 %v259
    %v296 = vunpack.c.l.b16 %v260
    %v297 = vunpack.c.l.b16 %v261
    %v298 = vunpack.c.l.b16 %v262
    %v299 = vunpack.c.l.b16 %v263
    %v300 = vunpack.c.l.b16 %v264
    %v301 = vunpack.c.l.b16 %v265
    %v302 = vunpack.c.l.b16 %v266
    %v303 = vunpack.c.l.b16 %v267
    %v304 = vunpack.c.l.b16 %v268
    %v305 = vunpack.c.l.b16 %v269
    %v306 = vpack.c.b16 %v291, %v290
    %v307 = vpack.c.b16 %v293, %v292
    %v308 = vpack.c.b16 %v295, %v294
    %v309 = vpack.c.b16 %v297, %v296
    %v310 = vpack.c.b16 %v299, %v298
    %v311 = vpack.c.b16 %v301, %v300
    %v312 = vpack.c.b16 %v303, %v302
    %v313 = vpack.c.b16 %v305, %v304
    %322 = vmatprep.subr.bf16.mxu0 0
    %323 = vmatpush1.bf16.xpose.msra.mxu0 %v306
    %324 = vmatprep.subr.bf16.mxu0 0
    %325 = vmatpush1.bf16.xpose.msra.mxu0 %v307
    %326 = vmatprep.subr.bf16.mxu0 0
    %327 = vmatpush1.bf16.xpose.msra.mxu0 %v308
    %328 = vmatprep.subr.bf16.mxu0 0
    %329 = vmatpush1.bf16.xpose.msra.mxu0 %v309
    %330 = vmatprep.subr.bf16.mxu0 0
    %331 = vmatpush1.bf16.xpose.msra.mxu0 %v310
    %332 = vmatprep.subr.bf16.mxu0 0
    %333 = vmatpush1.bf16.xpose.msra.mxu0 %v311
    %334 = vmatprep.subr.bf16.mxu0 0
    %335 = vmatpush1.bf16.xpose.msra.mxu0 %v312
    %336 = vmatprep.subr.bf16.mxu0 0
    %337 = vmatpush1.bf16.xpose.msra.mxu0 %v313
    %338 = vmatprep.subr.bf16.mxu0 0
    %339 = vmatpush1.bf16.xpose.msra.mxu0 0
    %340 = vmatprep.subr.bf16.mxu0 0
    %341 = vmatpush1.bf16.xpose.msra.mxu0 0
    %342 = vmatprep.subr.bf16.mxu0 0
    %343 = vmatpush1.bf16.xpose.msra.mxu0 0
    %344 = vmatprep.subr.bf16.mxu0 0
    %345 = vmatpush1.bf16.xpose.msra.mxu0 0
    %346 = vmatprep.subr.bf16.mxu0 0
    %347 = vmatpush1.bf16.xpose.msra.mxu0 0
    %348 = vmatprep.subr.bf16.mxu0 0
    %349 = vmatpush1.bf16.xpose.msra.mxu0 0
    %350 = vmatprep.subr.bf16.mxu0 0
    %351 = vmatpush1.bf16.xpose.msra.mxu0 0
    %352 = vmatprep.subr.bf16.mxu0 0
    %353 = vmatpush1.bf16.xpose.msra.mxu0 0
    %354 = vmatprep.mubr.bf16.mxu0 0
    %355 = vmatmul.mubr.bf16.gmra.mrb[0].mxu0 %v273
    %v356 = vpop.f32.mrb[0].mxu0
    %v357 = vadd.f32 %v94, %v356
    %v358 = vpop.f32.mrb[0].mxu0
    %v359 = vpop.f32.mrb[0].mxu0
    %v360 = vpop.f32.mrb[0].mxu0
    %361 = vdwg.mxu0
    %vm362 = vcmask 1043456
    %v363 = vsel %vm362, %v357, -inf
    %v364 = vrot.slane %v363, 4
    %v365 = vmax.f32 %v363, %v364
    %v366 = vrot.slane %v365, 2
    %v367 = vmax.f32 %v365, %v366
    %v368 = vrot.slane %v367, 1
    %v369 = vmax.f32 %v367, %v368
    %vm370 = vcmp.eq.f32.partialorder %v357, %v369
    %v371 = vsel %vm370, %v74, 4
    %v372 = vsel %vm362, %v371, 2147483647
    %v373 = vrot.slane %v372, 4
    %vm374 = vcmp.lt.s32.totalorder %v372, %v373
    %v375 = vsel %vm374, %v372, %v373
    %v376 = vrot.slane %v375, 2
    %vm377 = vcmp.lt.s32.totalorder %v375, %v376
    %v378 = vsel %vm377, %v375, %v376
    %v379 = vrot.slane %v378, 1
    %vm380 = vcmp.lt.s32.totalorder %v378, %v379
    %v381 = vsel %vm380, %v378, %v379
    %vm382 = vcmp.eq.s32.totalorder %v381, %v270
    %v383 = vsel %vm382, 1, 0
    %v384 = vcvt.s32.f32 %v383
    %v385 = vmul.f32 %v384, %v271
    %vm386 = vcmask 1040384
    %v387 = vsel %vm386, %v385, 0.0
    %388 = vadd.xlane.f32.xlu0 %v387
    %v389 = vpop.xlane.xlu0 %388
    %v390 = vrot.slane %v389, 4
    %v391 = vadd.f32 %v389, %v390
    %v392 = vrot.slane %v391, 2
    %v393 = vadd.f32 %v391, %v392
    %v394 = vrot.slane %v393, 1
    %v395 = vadd.f32 %v393, %v394
    %s396 = vtos %v395
    %v397 = vstv %s396
    %v398 = vsel %vm386, %v271, 0.0
    %399 = vadd.xlane.f32.xlu0 %v398
    %v400 = vpop.xlane.xlu0 %399
    %v401 = vrot.slane %v400, 4
    %v402 = vadd.f32 %v400, %v401
    %v403 = vrot.slane %v402, 2
    %v404 = vadd.f32 %v402, %v403
    %v405 = vrot.slane %v404, 1
    %v406 = vadd.f32 %v404, %v405
    %s407 = vtos %v406
    %v408 = vstv %s407
    %v409 = vmax.f32 %v408, 1.0
    %v410 = vrcp.pop %v409
    %v411 = vmul.f32 %v397, %v410
    %vm412 = vcmask 0
    %413 = vst.msk [vmem:[#allocation7] sm:$0x1] %vm412, %v411
    %v414 = vmul.f32 %v384, %v272
    %v415 = vsel %vm386, %v414, 0.0
    %416 = vadd.xlane.f32.xlu0 %v415
    %v417 = vpop.xlane.xlu0 %416
    %v418 = vrot.slane %v417, 4
    %v419 = vadd.f32 %v417, %v418
    %v420 = vrot.slane %v419, 2
    %v421 = vadd.f32 %v419, %v420
    %v422 = vrot.slane %v421, 1
    %v423 = vadd.f32 %v421, %v422
    %s424 = vtos %v423
    %v425 = vstv %s424
    %v426 = vsel %vm386, %v272, 0.0
    %427 = vadd.xlane.f32.xlu0 %v426
    %v428 = vpop.xlane.xlu0 %427
    %v429 = vrot.slane %v428, 4
    %v430 = vadd.f32 %v428, %v429
    %v431 = vrot.slane %v430, 2
    %v432 = vadd.f32 %v430, %v431
    %v433 = vrot.slane %v432, 1
    %v434 = vadd.f32 %v432, %v433
    %s435 = vtos %v434
    %v436 = vstv %s435
    %v437 = vmax.f32 %v436, 1.0
    %v438 = vrcp.pop %v437
    %v439 = vmul.f32 %v425, %v438
    %440 = vst.msk [vmem:[#allocation8] sm:$0x1] %vm412, %v439
    // Predicated region
    $region41: #{tpu_custom_call.1} parent=1 // pred_check
      _
    $region42: #{tpu_custom_call.1} parent=1 // pred_check_branch
      %442 = sbr.rel (0) target = $region44
    $region43: #{tpu_custom_call.1} parent=1 // pred_region
      %s444 = ssub.s32 16, 16
      %445 = vsyncadd [#allocation4], %s444
      %s447 = sshll.u32 [#allocation7], 4
      %s448 = int_to_ptr.vmem [resolvable:$true] %s447
      %450 = dma.vmem_to_hbm [thread:$0]  %s448, 16, %s6, [#allocation4]
    $region44: #{tpu_custom_call.1} parent=1 // pred_fallthru
      _
    // Predicated region
    $region45: #{tpu_custom_call.1} parent=1 // pred_check
      _
    $region46: #{tpu_custom_call.1} parent=1 // pred_check_branch
      %452 = sbr.rel (0) target = $region48
    $region47: #{tpu_custom_call.1} parent=1 // pred_region
      %s454 = ssub.s32 16, 16
      %455 = vsyncadd [#allocation9], %s454
      %s457 = sshll.u32 [#allocation8], 4
      %s458 = int_to_ptr.vmem [resolvable:$true] %s457
      %460 = dma.vmem_to_hbm [thread:$0]  %s458, 16, %s7, [#allocation9]
    $region48: #{tpu_custom_call.1} parent=1 // pred_fallthru
      _
    // Predicated region
    $region49: #{tpu_custom_call.1} parent=1 // pred_check
      _
    $region50: #{tpu_custom_call.1} parent=1 // pred_check_branch
      %462 = sbr.rel (0) target = $region52
    $region51: #{tpu_custom_call.1} parent=1 // pred_region
      %463 = dma.done [#allocation4], 16
    $region52: #{tpu_custom_call.1} parent=1 // pred_fallthru
      _
    // Predicated region
    $region53: #{tpu_custom_call.1} parent=1 // pred_check
      _
    $region54: #{tpu_custom_call.1} parent=1 // pred_check_branch
      %465 = sbr.rel (0) target = $region56
    $region55: #{tpu_custom_call.1} parent=1 // pred_region
      %466 = dma.done [#allocation9], 16
    $region56: #{tpu_custom_call.1} parent=1 // pred_fallthru
      _
    %467 = vsyncpa [#allocation3], 1
    %468 = vsyncpa [#allocation6], 1
    %469 = vsyncpa [#allocation4], 1
    %470 = vsyncpa [#allocation9], 1

</llo_original>
